<compile_context>
chip_gen: v7x
topology: tpu7x:2x2x1
jax: 0.10.0
libtpu: 0.0.40
codegen_flags: <defaults>
</compile_context>

<pallas_src>
import functools

import jax
import jax.numpy as jnp
from jax.experimental import pallas as pl
from jax.experimental.pallas import tpu as pltpu


LANE = 128
VMEM_LIMIT = 48 * 1024 * 1024   # <= ~48 MiB: headroom on v7x (64 MiB/TC)


def _round_up(x, m):
    return ((x + m - 1) // m) * m


def _mish(x, approx):
    # mish(x) = x * tanh(softplus(x)) == x * u / (u + 2) with u = t*(t+2),
    # t = e^x.  One exp on the EUP instead of softplus+tanh; the clamp keeps
    # exp finite (for x >= 20 the factor is 1 to f32 precision -> mish(x) = x).
    t = jnp.exp(jnp.minimum(x, 20.0))
    u = t * (t + 2.0)
    return x * u * pl.reciprocal(u + 2.0, approx=approx)


def _msg_chunk(tmm):
    """Largest K-chunk (multiple of 128, <= 1024) dividing the message block."""
    if tmm <= 1024:
        return tmm
    for c in range(1024, 0, -LANE):
        if tmm % c == 0:
            return c
    return LANE


# ----------------------------------------------------------------------------
# Kernel 1: per-relation residual predicate MLP (fused over one arity group).
#   out = x + W2 @ mish(W1 @ x + b1) + b2        (messages stored in bf16)
# The per-tile relation id is scalar-prefetched and selects the weight block
# in the index_map, so a relation's weights stay resident while its row tiles
# stream through (identical consecutive block indices skip the DMA).
# ----------------------------------------------------------------------------
def _relation_msg_kernel(rid_ref, x_ref, w1_ref, b1_ref, w2_ref, b2_ref, o_ref,
                         *, compute_dtype, approx):
    del rid_ref  # only used by the index_maps (weight selection)
    x = x_ref[...]                                              # [tm, d_pad] f32
    h = jnp.dot(x.astype(compute_dtype), w1_ref[0],
                preferred_element_type=jnp.float32) + b1_ref[0]
    h = _mish(h, approx)
    y = jnp.dot(h.astype(compute_dtype), w2_ref[0],
                preferred_element_type=jnp.float32) + b2_ref[0]
    o_ref[...] = (x + y).astype(o_ref.dtype)


def _relation_messages(rel_tile_ids, x, w1_stack, b1_stack, w2_stack, b2_stack,
                       tm, compute_dtype, approx):
    tt, d_pad = x.shape
    n_tiles = tt // tm
    kernel = functools.partial(_relation_msg_kernel,
                               compute_dtype=compute_dtype, approx=approx)
    return pl.pallas_call(
        kernel,
        out_shape=jax.ShapeDtypeStruct((tt, d_pad), compute_dtype),
        grid_spec=pltpu.PrefetchScalarGridSpec(
            num_scalar_prefetch=1,
            grid=(n_tiles,),
            in_specs=[
                pl.BlockSpec((tm, d_pad), lambda t, rid: (t, 0)),
                pl.BlockSpec((1, d_pad, d_pad), lambda t, rid: (rid[t], 0, 0)),
                pl.BlockSpec((1, 1, d_pad), lambda t, rid: (rid[t], 0, 0)),
                pl.BlockSpec((1, d_pad, d_pad), lambda t, rid: (rid[t], 0, 0)),
                pl.BlockSpec((1, 1, d_pad), lambda t, rid: (rid[t], 0, 0)),
            ],
            out_specs=pl.BlockSpec((tm, d_pad), lambda t, rid: (t, 0)),
        ),
        compiler_params=pltpu.CompilerParams(
            dimension_semantics=("parallel",),
            vmem_limit_bytes=VMEM_LIMIT,
        ),
    )(rel_tile_ids, x, w1_stack, b1_stack, w2_stack, b2_stack)


# ----------------------------------------------------------------------------
# Kernel 2: scatter-add (one-hot matmul into an f32 VMEM accumulator) fused
# with the update MLP.  grid = (node tiles, message blocks); the message axis
# is a trailing reduction.  When there is a single message block its block
# index is constant, so it is DMA'd once and stays resident across node tiles.
# ----------------------------------------------------------------------------
def _agg_update_kernel(idx_ref, msg_ref, emb_ref, w1_ref, b1_ref, w2_ref,
                       b2_ref, o_ref, acc_ref, *, node_tile, msg_block,
                       sub_rows, compute_dtype, approx):
    n = pl.program_id(0)
    m = pl.program_id(1)

    @pl.when(m == 0)
    def _():
        acc_ref[...] = jnp.zeros_like(acc_ref)

    # One-hot scatter-add, chunked over the message block (static unroll).
    # The big iota is hoisted; the per-chunk shift touches only the small
    # [1, sub_rows] index vector.
    row_ids = jax.lax.broadcasted_iota(jnp.int32, (node_tile, sub_rows), 0)
    node_base = n * node_tile
    for s in range(msg_block // sub_rows):
        lo = s * sub_rows
        local = idx_ref[:, lo:lo + sub_rows] - node_base          # [1, sub]
        onehot = (row_ids == local).astype(compute_dtype)          # exact 0/1
        acc_ref[...] += jnp.dot(onehot, msg_ref[lo:lo + sub_rows, :],
                                preferred_element_type=jnp.float32)

    @pl.when(m == pl.num_programs(1) - 1)
    def _():
        # Update MLP: single K = 2*e_pad contraction over concat(sum_msg, emb)
        # (fills the 256-deep MXU on v6e/v7x), then mish, then the out layer.
        cat = jnp.concatenate([acc_ref[...], emb_ref[...]], axis=1)
        h = jnp.dot(cat.astype(compute_dtype), w1_ref[...],
                    preferred_element_type=jnp.float32) + b1_ref[...]
        h = _mish(h, approx)
        o_ref[...] = (jnp.dot(h.astype(compute_dtype), w2_ref[...],
                              preferred_element_type=jnp.float32) + b2_ref[...])


def _aggregate_update(idx2d, messages, emb_p, w1, b1, w2, b2,
                      tn, tmm, compute_dtype, approx):
    n_pad, e_pad = emb_p.shape
    m_pad = messages.shape[0]
    kernel = functools.partial(_agg_update_kernel, node_tile=tn, msg_block=tmm,
                               sub_rows=_msg_chunk(tmm),
                               compute_dtype=compute_dtype, approx=approx)
    resident = lambda shp: pl.BlockSpec(shp, lambda n, m: (0,) * len(shp))
    return pl.pallas_call(
        kernel,
        out_shape=jax.ShapeDtypeStruct((n_pad, e_pad), jnp.float32),
        grid_spec=pltpu.PrefetchScalarGridSpec(
            num_scalar_prefetch=0,
            grid=(n_pad // tn, m_pad // tmm),
            in_specs=[
                pl.BlockSpec((1, tmm), lambda n, m: (0, m)),       # indices
                pl.BlockSpec((tmm, e_pad), lambda n, m: (m, 0)),   # messages
                pl.BlockSpec((tn, e_pad), lambda n, m: (n, 0)),    # embeddings
                resident(w1.shape), resident(b1.shape),
                resident(w2.shape), resident(b2.shape),
            ],
            out_specs=pl.BlockSpec((tn, e_pad), lambda n, m: (n, 0)),
            scratch_shapes=[pltpu.VMEM((tn, e_pad), jnp.float32)],
        ),
        compiler_params=pltpu.CompilerParams(
            dimension_semantics=("parallel", "arbitrary"),
            vmem_limit_bytes=VMEM_LIMIT,
        ),
    )(idx2d, messages, emb_p, w1, b1, w2, b2)


# ----------------------------------------------------------------------------
# One-time parameter preprocessing (padding / stacking / bf16 casts hoisted
# out of the forward pass).  Exact: padded rows/cols are zero, mish(0) = 0.
# ----------------------------------------------------------------------------
def _pad_blocked_linear(w, b, arity, e, e_pad):
    """Expand a [A*E, A*E] linear (slot-blocked) to [A*E_pad, A*E_pad]."""
    w4 = w.reshape(arity, e, arity, e)
    w_p = jnp.zeros((arity, e_pad, arity, e_pad), w.dtype)
    w_p = w_p.at[:, :e, :, :e].set(w4).reshape(arity * e_pad, arity * e_pad)
    b_p = jnp.zeros((arity, e_pad), b.dtype)
    b_p = b_p.at[:, :e].set(b.reshape(arity, e)).reshape(1, arity * e_pad)
    return w_p, b_p


def prepare_params(params, compute_dtype=jnp.bfloat16):
    e = params["embedding_size"]
    e_pad = _round_up(e, LANE)
    h_dim = 2 * e
    h_pad = _round_up(h_dim, LANE)

    by_arity = {}
    for name, p in params["relations"].items():
        if p["arity"] <= 0:
            continue
        by_arity.setdefault(p["arity"], []).append((name, p))

    groups = {}
    for arity, items in sorted(by_arity.items()):
        d_pad = arity * e_pad
        w1s, b1s, w2s, b2s, slots = [], [], [], [], {}
        for j, (name, p) in enumerate(items):
            slots[name] = j
            w1p, b1p = _pad_blocked_linear(p["w1"], p["b1"], arity, e, e_pad)
            w2p, b2p = _pad_blocked_linear(p["w2"], p["b2"], arity, e, e_pad)
            w1s.append(w1p); b1s.append(b1p); w2s.append(w2p); b2s.append(b2p)
        groups[arity] = {
            "slots": slots,
            "w1": jnp.stack(w1s).astype(compute_dtype),
            "b1": jnp.stack(b1s).reshape(len(items), 1, d_pad),
            "w2": jnp.stack(w2s).astype(compute_dtype),
            "b2": jnp.stack(b2s).reshape(len(items), 1, d_pad),
        }

    # Update MLP: first layer split by the concat halves, stacked into one
    # [2*e_pad, h_pad] weight (rows [0:e] <- sum_msg half, [e_pad:e_pad+e] <- emb).
    u = params["update"]
    w1u = jnp.zeros((2 * e_pad, h_pad), jnp.float32)
    w1u = w1u.at[:e, :h_dim].set(u["wu1"][:e])
    w1u = w1u.at[e_pad:e_pad + e, :h_dim].set(u["wu1"][e:])
    b1u = jnp.zeros((1, h_pad), jnp.float32).at[:, :h_dim].set(u["b1"])
    w2u = jnp.zeros((h_pad, e_pad), jnp.float32).at[:h_dim, :e].set(u["w2"])
    b2u = jnp.zeros((1, e_pad), jnp.float32).at[:, :e].set(u["b2"])

    return {
        "e": e, "e_pad": e_pad, "h_pad": h_pad,
        "compute_dtype": compute_dtype,
        "groups": groups,
        "update": {"w1": w1u.astype(compute_dtype), "b1": b1u,
                   "w2": w2u.astype(compute_dtype), "b2": b2u},
    }


# ----------------------------------------------------------------------------
# Module wrapper (SumRelationMessagePassing.forward)
# ----------------------------------------------------------------------------
def init_params(key, embedding_size, relation_arities):
    """relation_arities: ordered dict relation_name -> arity (arity > 0 only)."""
    params = {"relations": {}, "embedding_size": embedding_size}
    e = embedding_size

    def linear(key, din, dout):
        k1, k2 = jax.random.split(key)
        scale = 1.0 / jnp.sqrt(din)
        w = jax.random.uniform(k1, (din, dout), jnp.float32, -scale, scale)
        b = jax.random.uniform(k2, (1, dout), jnp.float32, -scale, scale)
        return w, b

    for name, arity in relation_arities.items():
        d = arity * e
        key, k1, k2 = jax.random.split(key, 3)
        w1, b1 = linear(k1, d, d)
        w2, b2 = linear(k2, d, d)
        params["relations"][name] = {"arity": arity, "w1": w1, "b1": b1,
                                     "w2": w2, "b2": b2}

    key, k1, k2 = jax.random.split(key, 3)
    wu1, bu1 = linear(k1, 2 * e, 2 * e)
    wu2, bu2 = linear(k2, 2 * e, e)
    params["update"] = {"wu1": wu1, "b1": bu1, "w2": wu2, "b2": bu2}
    return params


def sum_relation_message_passing(prepared, node_embeddings, relations,
                                 row_tile=256, node_tile=256, msg_tile=1024):
    """Pallas implementation of SumRelationMessagePassing.forward."""
    e, e_pad = prepared["e"], prepared["e_pad"]
    cdt = prepared["compute_dtype"]
    approx = cdt != jnp.float32
    n = node_embeddings.shape[0]
    row_tile = _round_up(row_tile, 8)
    node_tile = _round_up(node_tile, 8)
    msg_tile = _round_up(msg_tile, LANE)

    # Pad nodes; reserve >= 1 dummy row (padded message rows scatter into it),
    # and try to get >= 2 node tiles so v7x megacore can shard the node axis.
    tn = min(node_tile, _round_up(n + 1, 8))
    if _round_up(n + 1, tn) == tn and tn >= 16:
        tn = _round_up(tn // 2, 8)
    n_pad = _round_up(n + 1, tn)
    emb_p = jnp.zeros((n_pad, e_pad), jnp.float32)
    emb_p = emb_p.at[:n, :e].set(node_embeddings.astype(jnp.float32))

    msgs_list, idx_list = [], []
    for arity in sorted(prepared["groups"]):
        g = prepared["groups"][arity]
        active = []
        for name in g["slots"]:
            if name not in relations:
                continue
            idx = jnp.asarray(relations[name], jnp.int32).reshape(-1)
            if idx.shape[0] == 0:
                continue
            active.append((name, idx))
        if not active:
            continue

        d_pad = arity * e_pad
        max_t = max(int(idx.shape[0]) // arity for _, idx in active)
        # Fill the 256-deep MXU (v6e/v7x) when the data is big enough.
        tm = min(row_tile, _round_up(max_t, 256 if max_t >= 128 else 8))

        x_parts, i_parts, rel_tile_ids = [], [], []
        for name, idx in active:
            t = idx.shape[0] // arity
            t_pad = _round_up(t, tm)
            xg = emb_p[idx].reshape(t, d_pad)                    # gather (XLA)
            xg = jnp.pad(xg, ((0, t_pad - t), (0, 0)))
            x_parts.append(xg)
            i_parts.append(jnp.pad(idx, (0, (t_pad - t) * arity),
                                   constant_values=n))           # -> dummy row
            rel_tile_ids += [g["slots"][name]] * (t_pad // tm)

        x_group = jnp.concatenate(x_parts, axis=0)
        rel_tile_ids = jnp.asarray(rel_tile_ids, jnp.int32)
        out_group = _relation_messages(rel_tile_ids, x_group, g["w1"], g["b1"],
                                       g["w2"], g["b2"], tm, cdt, approx)
        msgs_list.append(out_group.reshape(-1, e_pad))           # .view(-1, E)
        idx_list.append(jnp.concatenate(i_parts, axis=0))

    if msgs_list:
        messages = jnp.concatenate(msgs_list, axis=0)
        indices = jnp.concatenate(idx_list, axis=0)
    else:  # no active relations: sum_msg == 0
        messages = jnp.zeros((LANE, e_pad), cdt)
        indices = jnp.full((LANE,), n, jnp.int32)

    m_rows = messages.shape[0]
    msg_bytes = jnp.dtype(cdt).itemsize
    # Keep the whole message tensor as a single (VMEM-resident) block when it
    # fits in ~2 MiB; otherwise stream msg_tile-row blocks (big -> short m grid).
    resident_rows = max(LANE, ((2 << 20) // (e_pad * msg_bytes)) // LANE * LANE)
    tmm = _round_up(m_rows, LANE)
    if tmm > max(msg_tile, resident_rows):
        tmm = msg_tile
    m_pad = _round_up(m_rows, tmm)
    messages = jnp.pad(messages, ((0, m_pad - m_rows), (0, 0)))
    indices = jnp.pad(indices, (0, m_pad - m_rows),
                      constant_values=n).reshape(1, m_pad)

    u = prepared["update"]
    out_p = _aggregate_update(indices, messages, emb_p, u["w1"], u["b1"],
                              u["w2"], u["b2"], tn, tmm, cdt, approx)
    return out_p[:n, :e]


# ----------------------------------------------------------------------------
# Pure-JAX f32 reference (mirrors the torch module) for validation.
# ----------------------------------------------------------------------------
def _reference(params, node_embeddings, relations):
    e = params["embedding_size"]
    dot = functools.partial(jnp.dot, precision=jax.lax.Precision.HIGHEST)

    def mish(x):
        return x * jnp.tanh(jax.nn.softplus(x))

    msgs, idxs = [], []
    for name, p in params["relations"].items():
        if name not in relations:
            continue
        idx = jnp.asarray(relations[name], jnp.int32).reshape(-1)
        if idx.shape[0] == 0:
            continue
        x = node_embeddings[idx].reshape(-1, p["arity"] * e)
        h = mish(dot(x, p["w1"]) + p["b1"])
        y = x + dot(h, p["w2"]) + p["b2"]
        msgs.append(y.reshape(-1, e))
        idxs.append(idx)
    messages = jnp.concatenate(msgs, axis=0)
    indices = jnp.concatenate(idxs, axis=0)
    sum_msg = jnp.zeros_like(node_embeddings).at[indices].add(messages)
    u = params["update"]
    cat = jnp.concatenate([sum_msg, node_embeddings], axis=1)
    h = mish(dot(cat, u["wu1"]) + u["b1"])
    return dot(h, u["w2"]) + u["b2"]


if __name__ == "__main__":
    key = jax.random.PRNGKey(0)

    N = 16          # number of objects/nodes
    E = 32          # embedding_size
    relation_arities = {"on": 2, "clear": 1}

    key, kp, ke, k_on, k_clear = jax.random.split(key, 5)
    params = init_params(kp, E, relation_arities)

    node_embeddings = jax.random.normal(ke, (N, E), jnp.float32)
    relations = {
        # "on": 8 ground atoms of arity 2 -> flat index vector of length 16
        "on": jax.random.randint(k_on, (8 * 2,), 0, N, jnp.int32),
        # "clear": 6 ground atoms of arity 1 -> flat index vector of length 6
        "clear": jax.random.randint(k_clear, (6,), 0, N, jnp.int32),
    }

    ref = _reference(params, node_embeddings, relations)

    # f32 path: tight check of the kernel structure / padding / scatter.
    prep_f32 = prepare_params(params, compute_dtype=jnp.float32)
    out_f32 = sum_relation_message_passing(prep_f32, node_embeddings, relations)
    out_f32 = jax.block_until_ready(out_f32)
    assert out_f32.shape == (N, E) and out_f32.dtype == jnp.float32
    assert jnp.allclose(out_f32, ref, atol=5e-3, rtol=5e-3), \
        f"f32 max abs diff {jnp.max(jnp.abs(out_f32 - ref))}"

    # bf16 MXU path (performance default): loose semantic check vs f32 ref.
    prep_bf16 = prepare_params(params, compute_dtype=jnp.bfloat16)
    out_bf16 = sum_relation_message_passing(prep_bf16, node_embeddings, relations)
    out_bf16 = jax.block_until_ready(out_bf16)
    assert out_bf16.shape == (N, E) and out_bf16.dtype == jnp.float32
    assert jnp.allclose(out_bf16, ref, atol=2.5e-1, rtol=5e-2), \
        f"bf16 max abs diff {jnp.max(jnp.abs(out_bf16 - ref))}"

    print("KERNEL_OK")
</pallas_src>

<mosaic_0001>
module attributes {stable_mosaic.version = 11 : i64} {
  func.func @_relation_msg_kernel(%arg0: i32, %arg1: memref<1xi32, #tpu.memory_space<smem>>, %arg2: memref<8x128xf32, #tpu.memory_space<vmem>>, %arg3: memref<1x128x128xf32, #tpu.memory_space<vmem>>, %arg4: memref<1x1x128xf32, #tpu.memory_space<vmem>>, %arg5: memref<1x128x128xf32, #tpu.memory_space<vmem>>, %arg6: memref<1x1x128xf32, #tpu.memory_space<vmem>>, %arg7: memref<8x128xf32, #tpu.memory_space<vmem>>) attributes {dimension_semantics = [#tpu.dimension_semantics<parallel>], iteration_bounds = array<i64: 1>, scalar_prefetch = 1 : i64, scratch_operands = 0 : i64, tpu.core_type = #tpu.core_type<tc>, window_params = [{transform_indices = @transform_0, window_bounds = array<i64: 8, 128>}, {transform_indices = @transform_1, window_bounds = array<i64: 1, 128, 128>}, {transform_indices = @transform_2, window_bounds = array<i64: 1, 1, 128>}, {transform_indices = @transform_3, window_bounds = array<i64: 1, 128, 128>}, {transform_indices = @transform_4, window_bounds = array<i64: 1, 1, 128>}, {transform_indices = @transform_5, window_bounds = array<i64: 8, 128>}]} {
    %c0 = arith.constant 0 : index
    %c0_0 = arith.constant 0 : index
    %0 = vector.load %arg2[%c0, %c0_0] : memref<8x128xf32, #tpu.memory_space<vmem>>, vector<8x128xf32>
    %c0_1 = arith.constant 0 : index
    %c0_2 = arith.constant 0 : index
    %c0_3 = arith.constant 0 : index
    %1 = vector.load %arg3[%c0_1, %c0_2, %c0_3] : memref<1x128x128xf32, #tpu.memory_space<vmem>>, vector<1x128x128xf32>
    %2 = vector.shape_cast %1 : vector<1x128x128xf32> to vector<128x128xf32>
    %cst = arith.constant dense<0.000000e+00> : vector<8x128xf32>
    %3 = tpu.matmul %0, %2, %cst {dimension_numbers = #tpu.dot_dimension_numbers<[1], [0], [0], [1], [0, 0, 1, 1], [], []>} : vector<8x128xf32>, vector<128x128xf32>, vector<8x128xf32> -> vector<8x128xf32>
    %c0_4 = arith.constant 0 : index
    %c0_5 = arith.constant 0 : index
    %c0_6 = arith.constant 0 : index
    %4 = vector.load %arg4[%c0_4, %c0_5, %c0_6] : memref<1x1x128xf32, #tpu.memory_space<vmem>>, vector<1x1x128xf32>
    %5 = vector.shape_cast %4 : vector<1x1x128xf32> to vector<1x128xf32>
    %6 = vector.broadcast %5 : vector<1x128xf32> to vector<8x128xf32>
    %7 = arith.addf %3, %6 : vector<8x128xf32>
    %cst_7 = arith.constant 2.000000e+01 : f32
    %8 = vector.broadcast %cst_7 : f32 to vector<8x128xf32>
    %9 = arith.minimumf %7, %8 : vector<8x128xf32>
    %10 = math.exp %9 : vector<8x128xf32>
    %cst_8 = arith.constant 2.000000e+00 : f32
    %11 = vector.broadcast %cst_8 : f32 to vector<8x128xf32>
    %12 = arith.addf %10, %11 : vector<8x128xf32>
    %13 = arith.mulf %10, %12 : vector<8x128xf32>
    %14 = arith.mulf %7, %13 : vector<8x128xf32>
    %cst_9 = arith.constant 2.000000e+00 : f32
    %15 = vector.broadcast %cst_9 : f32 to vector<8x128xf32>
    %16 = arith.addf %13, %15 : vector<8x128xf32>
    %17 = tpu.reciprocal %16 : vector<8x128xf32> -> vector<8x128xf32>
    %18 = arith.mulf %14, %17 : vector<8x128xf32>
    %c0_10 = arith.constant 0 : index
    %c0_11 = arith.constant 0 : index
    %c0_12 = arith.constant 0 : index
    %19 = vector.load %arg5[%c0_10, %c0_11, %c0_12] : memref<1x128x128xf32, #tpu.memory_space<vmem>>, vector<1x128x128xf32>
    %20 = vector.shape_cast %19 : vector<1x128x128xf32> to vector<128x128xf32>
    %cst_13 = arith.constant dense<0.000000e+00> : vector<8x128xf32>
    %21 = tpu.matmul %18, %20, %cst_13 {dimension_numbers = #tpu.dot_dimension_numbers<[1], [0], [0], [1], [0, 0, 1, 1], [], []>} : vector<8x128xf32>, vector<128x128xf32>, vector<8x128xf32> -> vector<8x128xf32>
    %c0_14 = arith.constant 0 : index
    %c0_15 = arith.constant 0 : index
    %c0_16 = arith.constant 0 : index
    %22 = vector.load %arg6[%c0_14, %c0_15, %c0_16] : memref<1x1x128xf32, #tpu.memory_space<vmem>>, vector<1x1x128xf32>
    %23 = vector.shape_cast %22 : vector<1x1x128xf32> to vector<1x128xf32>
    %24 = vector.broadcast %23 : vector<1x128xf32> to vector<8x128xf32>
    %25 = arith.addf %21, %24 : vector<8x128xf32>
    %26 = arith.addf %0, %25 : vector<8x128xf32>
    %c0_17 = arith.constant 0 : index
    %c0_18 = arith.constant 0 : index
    %27 = vector.load %arg7[%c0_17, %c0_18] : memref<8x128xf32, #tpu.memory_space<vmem>>, vector<8x128xf32>
    tpu.vector_store %arg7[%c0_17, %c0_18], %26 {strides = array<i32>} : memref<8x128xf32, #tpu.memory_space<vmem>>, vector<8x128xf32>,
    return
  }
  func.func @transform_0(%arg0: i32, %arg1: memref<1xi32, #tpu.memory_space<smem>>) -> (i32, i32) {
    %c0_i32 = arith.constant 0 : i32
    %c0_i32_0 = arith.constant 0 : i32
    return %arg0, %c0_i32 : i32, i32
  }
  func.func @transform_1(%arg0: i32, %arg1: memref<1xi32, #tpu.memory_space<smem>>) -> (i32, i32, i32) {
    %0 = arith.index_cast %arg0 : i32 to index
    %1 = memref.load %arg1[%0] : memref<1xi32, #tpu.memory_space<smem>>
    %c0_i32 = arith.constant 0 : i32
    %c0_i32_0 = arith.constant 0 : i32
    %c0_i32_1 = arith.constant 0 : i32
    return %1, %c0_i32, %c0_i32_0 : i32, i32, i32
  }
  func.func @transform_2(%arg0: i32, %arg1: memref<1xi32, #tpu.memory_space<smem>>) -> (i32, i32, i32) {
    %0 = arith.index_cast %arg0 : i32 to index
    %1 = memref.load %arg1[%0] : memref<1xi32, #tpu.memory_space<smem>>
    %c0_i32 = arith.constant 0 : i32
    %c0_i32_0 = arith.constant 0 : i32
    %c0_i32_1 = arith.constant 0 : i32
    return %1, %c0_i32, %c0_i32_0 : i32, i32, i32
  }
  func.func @transform_3(%arg0: i32, %arg1: memref<1xi32, #tpu.memory_space<smem>>) -> (i32, i32, i32) {
    %0 = arith.index_cast %arg0 : i32 to index
    %1 = memref.load %arg1[%0] : memref<1xi32, #tpu.memory_space<smem>>
    %c0_i32 = arith.constant 0 : i32
    %c0_i32_0 = arith.constant 0 : i32
    %c0_i32_1 = arith.constant 0 : i32
    return %1, %c0_i32, %c0_i32_0 : i32, i32, i32
  }
  func.func @transform_4(%arg0: i32, %arg1: memref<1xi32, #tpu.memory_space<smem>>) -> (i32, i32, i32) {
    %0 = arith.index_cast %arg0 : i32 to index
    %1 = memref.load %arg1[%0] : memref<1xi32, #tpu.memory_space<smem>>
    %c0_i32 = arith.constant 0 : i32
    %c0_i32_0 = arith.constant 0 : i32
    %c0_i32_1 = arith.constant 0 : i32
    return %1, %c0_i32, %c0_i32_0 : i32, i32, i32
  }
  func.func @transform_5(%arg0: i32, %arg1: memref<1xi32, #tpu.memory_space<smem>>) -> (i32, i32) {
    %c0_i32 = arith.constant 0 : i32
    %c0_i32_0 = arith.constant 0 : i32
    return %arg0, %c0_i32 : i32, i32
  }
}

</mosaic_0001>

<llo_original>
// kernel: tpu_custom_call.1
$region0: #{tpu_custom_call.1}
  #allocation0 [shape = 'u32[]', space=smem, size = 0x4, offset = 0x4, fixed_abs, tag = 'smem constant byte address 0x4 - core index']
  #allocation1 [shape = 'u32[144,128]{1,0:T(1,128)}', space=vmem, size = 0x12000, scoped, tag = 'internal scratch']
  #allocation2 [shape = 's32[1]{0}', space=sflag, size = 0x4, scoped, tag = 'scoped memory for tpu_custom_call.1']
  #allocation3 [shape = 's32[1]{0:T(128)S(6)}', space=smem, size = 0x200, scoped, tag = 'prefetched SMEM operand 0']
  %s0 = inlined_call_operand.<no memory space> [shape: s32[1], index: 0, kind: input, shape index: {}]
  %s1 = inlined_call_operand.hbm [shape: f32[8,128], index: 1, kind: input, shape index: {}]
  %s2 = inlined_call_operand.hbm [shape: f32[1,128,128], index: 2, kind: input, shape index: {}]
  %s3 = inlined_call_operand.vmem [shape: f32[1,1,128], index: 3, kind: input, shape index: {}]
  %s4 = inlined_call_operand.hbm [shape: f32[1,128,128], index: 4, kind: input, shape index: {}]
  %s5 = inlined_call_operand.vmem [shape: f32[1,1,128], index: 5, kind: input, shape index: {}]
  %s6 = inlined_call_operand.hbm [shape: f32[8,128], index: 6, kind: output, shape index: {}]
  %s7 = sld [smem:[#allocation0]]
  $region42: #{tpu_custom_call.1} parent=0
    _
  %s9 = ssub.s32 1, %s7
  %s10 = scalar_select 0, %s9, %s7
  %11 = sst [smem:[#allocation3]] %s0
  $region1: #{tpu_custom_call.1} parent=0
    #allocation4 [shape = 'u8[4096]{0}', space=vmem, size = 0x1000, scoped, tag = 'input window, operand 1, single buffered']
    #allocation5 [shape = 's32[1]{0}', space=sflag, size = 0x4, scoped, tag = 'scoped memory for tpu_custom_call.1']
    #allocation6 [shape = 's32[1]{0}', space=sflag, size = 0x4, scoped, tag = 'scoped memory for tpu_custom_call.1']
    #allocation7 [shape = 'u8[65536]{0}', space=vmem, size = 0x10000, scoped, tag = 'input window, operand 2, single buffered']
    #allocation8 [shape = 's32[1]{0}', space=sflag, size = 0x4, scoped, tag = 'scoped memory for tpu_custom_call.1']
    #allocation9 [shape = 'u8[65536]{0}', space=vmem, size = 0x10000, scoped, tag = 'input window, operand 4, single buffered']
    #allocation10 [shape = 'u8[4096]{0}', space=vmem, size = 0x1000, scoped, tag = 'output window, operand 0, single buffered']
    %12 = vsyncpa [#allocation5], 0
    %13 = vsyncpa [#allocation8], 0
    %14 = vsyncpa [#allocation6], 0
    // Predicated region
    $region2: #{tpu_custom_call.1} parent=1 // pred_check
      _
    $region3: #{tpu_custom_call.1} parent=1 // pred_check_branch
      %16 = sbr.rel (0) target = $region5
    $region4: #{tpu_custom_call.1} parent=1 // pred_region
      %s18 = ssub.s32 128, 128
      %19 = vsyncadd [#allocation5], %s18
      %s21 = sshll.u32 [#allocation4], 4
      %s22 = int_to_ptr.vmem [resolvable:$true] %s21
      %24 = dma.hbm_to_vmem [thread:$0]  %s1, 128, %s22, [#allocation5]
    $region5: #{tpu_custom_call.1} parent=1 // pred_fallthru
      _
    // Predicated region
    $region6: #{tpu_custom_call.1} parent=1 // pred_check
      _
    $region7: #{tpu_custom_call.1} parent=1 // pred_check_branch
      %26 = sbr.rel (0) target = $region9
    $region8: #{tpu_custom_call.1} parent=1 // pred_region
      %s27 = sld [smem:[#allocation3]]
      %s29 = ssub.s32 2048, 2048
      %30 = vsyncadd [#allocation8], %s29
      %s31 = smul.addr %s27, 16
      %s32 = smul.addr %s31, 128
      %s33 = scalar_lea.hbm %s2, %s32
      %s34 = sshll.u32 [#allocation7], 4
      %s35 = int_to_ptr.vmem [resolvable:$true] %s34
      %40 = dma.hbm_to_vmem [thread:$0]  %s33, 2048, %s35, [#allocation8], 128, 128, 8
    $region9: #{tpu_custom_call.1} parent=1 // pred_fallthru
      _
    // Predicated region
    $region10: #{tpu_custom_call.1} parent=1 // pred_check
      _
    $region11: #{tpu_custom_call.1} parent=1 // pred_check_branch
      %42 = sbr.rel (0) target = $region13
    $region12: #{tpu_custom_call.1} parent=1 // pred_region
      %s43 = sld [smem:[#allocation3]]
      %p44 = scmp.lt.s32.totalorder %s43, 0
      %s45 = scalar_select %p44, %s43, 0
      %s46 = scalar_lea.vmem %s3, %s45
      %s47 = sld [smem:[#allocation3]]
    $region13: #{tpu_custom_call.1} parent=1 // pred_fallthru
      _
    // Predicated region
    $region14: #{tpu_custom_call.1} parent=1 // pred_check
      _
    $region15: #{tpu_custom_call.1} parent=1 // pred_check_branch
      %49 = sbr.rel (0) target = $region17
    $region16: #{tpu_custom_call.1} parent=1 // pred_region
      %s50 = sld [smem:[#allocation3]]
      %s52 = ssub.s32 2048, 2048
      %53 = vsyncadd [#allocation8], %s52
      %s54 = smul.addr %s50, 16
      %s55 = smul.addr %s54, 128
      %s56 = scalar_lea.hbm %s4, %s55
      %s57 = sshll.u32 [#allocation9], 4
      %s58 = int_to_ptr.vmem [resolvable:$true] %s57
      %63 = dma.hbm_to_vmem [thread:$0]  %s56, 2048, %s58, [#allocation8], 128, 128, 8
    $region17: #{tpu_custom_call.1} parent=1 // pred_fallthru
      _
    // Predicated region
    $region18: #{tpu_custom_call.1} parent=1 // pred_check
      _
    $region19: #{tpu_custom_call.1} parent=1 // pred_check_branch
      %65 = sbr.rel (0) target = $region21
    $region20: #{tpu_custom_call.1} parent=1 // pred_region
      %s66 = sld [smem:[#allocation3]]
      %p67 = scmp.lt.s32.totalorder %s66, 0
      %s68 = scalar_select %p67, %s66, 0
      %s69 = scalar_lea.vmem %s5, %s68
      %s70 = sld [smem:[#allocation3]]
    $region21: #{tpu_custom_call.1} parent=1 // pred_fallthru
      _
    // Predicated region
    $region22: #{tpu_custom_call.1} parent=1 // pred_check
      _
    $region23: #{tpu_custom_call.1} parent=1 // pred_check_branch
      %72 = sbr.rel (0) target = $region25
    $region24: #{tpu_custom_call.1} parent=1 // pred_region
      %73 = dma.done [#allocation5], 128
    $region25: #{tpu_custom_call.1} parent=1 // pred_fallthru
      _
    // Predicated region
    $region26: #{tpu_custom_call.1} parent=1 // pred_check
      _
    $region27: #{tpu_custom_call.1} parent=1 // pred_check_branch
      %75 = sbr.rel (0) target = $region29
    $region28: #{tpu_custom_call.1} parent=1 // pred_region
      %76 = dma.done [#allocation8], 2048
    $region29: #{tpu_custom_call.1} parent=1 // pred_fallthru
      _
    // Predicated region
    $region30: #{tpu_custom_call.1} parent=1 // pred_check
      _
    $region31: #{tpu_custom_call.1} parent=1 // pred_check_branch
      %78 = sbr.rel (0) target = $region33
    $region32: #{tpu_custom_call.1} parent=1 // pred_region
      %79 = dma.done [#allocation8], 2048
    $region33: #{tpu_custom_call.1} parent=1 // pred_fallthru
      _
    %s80 = sld [smem:[#allocation3]]
    %p81 = scmp.lt.s32.totalorder %s80, 0
    %s82 = scalar_select %p81, %s80, 0
    %s83 = scalar_lea.vmem %s3, %s82
    %s84 = sld [smem:[#allocation3]]
    %p85 = scmp.lt.s32.totalorder %s84, 0
    %s86 = scalar_select %p85, %s84, 0
    %s87 = scalar_lea.vmem %s5, %s86
    %s88 = sld [smem:[#allocation3]]
    %s89 = sld [smem:[#allocation3]]
    %p90 = scmp.lt.s32.totalorder %s89, 0
    %s91 = scalar_select %p90, %s89, 0
    %s92 = scalar_lea.vmem %s3, %s91
    %s93 = sld [smem:[#allocation3]]
    %s94 = sld [smem:[#allocation3]]
    %s95 = sld [smem:[#allocation3]]
    %p96 = scmp.lt.s32.totalorder %s95, 0
    %s97 = scalar_select %p96, %s95, 0
    %s98 = scalar_lea.vmem %s5, %s97
    %s99 = sld [smem:[#allocation3]]
    %v100 = vld [vmem:[#allocation4] sm:$0xff]
    %v101 = vld [vmem:[#allocation7] sm:$0xff]
    %v102 = vld [vmem:[#allocation7 + $0x8] sm:$0xff]
    %v103 = vld [vmem:[#allocation7 + $0x10] sm:$0xff]
    %v104 = vld [vmem:[#allocation7 + $0x18] sm:$0xff]
    %v105 = vld [vmem:[#allocation7 + $0x20] sm:$0xff]
    %v106 = vld [vmem:[#allocation7 + $0x28] sm:$0xff]
    %v107 = vld [vmem:[#allocation7 + $0x30] sm:$0xff]
    %v108 = vld [vmem:[#allocation7 + $0x38] sm:$0xff]
    %v109 = vld [vmem:[#allocation7 + $0x40] sm:$0xff]
    %v110 = vld [vmem:[#allocation7 + $0x48] sm:$0xff]
    %v111 = vld [vmem:[#allocation7 + $0x50] sm:$0xff]
    %v112 = vld [vmem:[#allocation7 + $0x58] sm:$0xff]
    %v113 = vld [vmem:[#allocation7 + $0x60] sm:$0xff]
    %v114 = vld [vmem:[#allocation7 + $0x68] sm:$0xff]
    %v115 = vld [vmem:[#allocation7 + $0x70] sm:$0xff]
    %v116 = vld [vmem:[#allocation7 + $0x78] sm:$0xff]
    %v117 = vld [vmem:[%s92] sm:$0x1]
    %v119 = vlaneseq
    %v120 = vshrl.u32 %v119, 7
    %v121 = vsub.s32 0, %v120
    %v122 = vrot.slane %v117, %v121
    %124 = vmatprep.subr.mxu0 0.0
    %125 = vmatpush1.msra.mxu0 %v101
    %126 = vmatprep.subr.mxu0 0.0
    %127 = vmatpush1.msra.mxu0 %v102
    %128 = vmatprep.subr.mxu0 0.0
    %129 = vmatpush1.msra.mxu0 %v103
    %130 = vmatprep.subr.mxu0 0.0
    %131 = vmatpush1.msra.mxu0 %v104
    %132 = vmatprep.subr.mxu0 0.0
    %133 = vmatpush1.msra.mxu0 %v105
    %134 = vmatprep.subr.mxu0 0.0
    %135 = vmatpush1.msra.mxu0 %v106
    %136 = vmatprep.subr.mxu0 0.0
    %137 = vmatpush1.msra.mxu0 %v107
    %138 = vmatprep.subr.mxu0 0.0
    %139 = vmatpush1.msra.mxu0 %v108
    %140 = vmatprep.subr.mxu0 0.0
    %141 = vmatpush1.msra.mxu0 %v109
    %142 = vmatprep.subr.mxu0 0.0
    %143 = vmatpush1.msra.mxu0 %v110
    %144 = vmatprep.subr.mxu0 0.0
    %145 = vmatpush1.msra.mxu0 %v111
    %146 = vmatprep.subr.mxu0 0.0
    %147 = vmatpush1.msra.mxu0 %v112
    %148 = vmatprep.subr.mxu0 0.0
    %149 = vmatpush1.msra.mxu0 %v113
    %150 = vmatprep.subr.mxu0 0.0
    %151 = vmatpush1.msra.mxu0 %v114
    %152 = vmatprep.subr.mxu0 0.0
    %153 = vmatpush1.msra.mxu0 %v115
    %154 = vmatprep.subr.mxu0 0.0
    %155 = vmatpush1.msra.mxu0 %v116
    %156 = vmatprep.subr.mxu0 0.0
    %157 = vmatpush1.msra.mxu0 0.0
    %158 = vmatprep.subr.mxu0 0.0
    %159 = vmatpush1.msra.mxu0 0.0
    %160 = vmatprep.subr.mxu0 0.0
    %161 = vmatpush1.msra.mxu0 0.0
    %162 = vmatprep.subr.mxu0 0.0
    %163 = vmatpush1.msra.mxu0 0.0
    %164 = vmatprep.subr.mxu0 0.0
    %165 = vmatpush1.msra.mxu0 0.0
    %166 = vmatprep.subr.mxu0 0.0
    %167 = vmatpush1.msra.mxu0 0.0
    %168 = vmatprep.subr.mxu0 0.0
    %169 = vmatpush1.msra.mxu0 0.0
    %170 = vmatprep.subr.mxu0 0.0
    %171 = vmatpush1.msra.mxu0 0.0
    %172 = vmatprep.subr.mxu0 0.0
    %173 = vmatpush1.msra.mxu0 0.0
    %174 = vmatprep.subr.mxu0 0.0
    %175 = vmatpush1.msra.mxu0 0.0
    %176 = vmatprep.subr.mxu0 0.0
    %177 = vmatpush1.msra.mxu0 0.0
    %178 = vmatprep.subr.mxu0 0.0
    %179 = vmatpush1.msra.mxu0 0.0
    %180 = vmatprep.subr.mxu0 0.0
    %181 = vmatpush1.msra.mxu0 0.0
    %182 = vmatprep.subr.mxu0 0.0
    %183 = vmatpush1.msra.mxu0 0.0
    %184 = vmatprep.subr.mxu0 0.0
    %185 = vmatpush1.msra.mxu0 0.0
    %186 = vmatprep.subr.mxu0 0.0
    %187 = vmatpush1.msra.mxu0 0.0
    %188 = vmatprep.mubr.f32.mxu0 0.0
    %189 = vmatmul.mubr.f32.gmra.mrb[0].mxu0 %v100
    %v190 = vpop.f32.mrb[0].mxu0
    %v191 = vadd.f32 %v122, %v190
    %v192 = vpop.f32.mrb[0].mxu0
    %193 = vdwg.mxu0
    %v194 = vmin.f32 %v191, 20.0
    %v195 = vmul.f32 %v194, 1.442695
    %v196 = vpow.pop %v195
    %v197 = vadd.f32 %v196, 2.0
    %v198 = vmul.f32 %v196, %v197
    %v199 = vmul.f32 %v191, %v198
    %v200 = vadd.f32 %v198, 2.0
    %v201 = vrcp.pop %v200
    %v202 = vmul.f32 %v199, %v201
    %v203 = vld [vmem:[#allocation9] sm:$0xff]
    %v204 = vld [vmem:[#allocation9 + $0x8] sm:$0xff]
    %v205 = vld [vmem:[#allocation9 + $0x10] sm:$0xff]
    %v206 = vld [vmem:[#allocation9 + $0x18] sm:$0xff]
    %v207 = vld [vmem:[#allocation9 + $0x20] sm:$0xff]
    %v208 = vld [vmem:[#allocation9 + $0x28] sm:$0xff]
    %v209 = vld [vmem:[#allocation9 + $0x30] sm:$0xff]
    %v210 = vld [vmem:[#allocation9 + $0x38] sm:$0xff]
    %v211 = vld [vmem:[#allocation9 + $0x40] sm:$0xff]
    %v212 = vld [vmem:[#allocation9 + $0x48] sm:$0xff]
    %v213 = vld [vmem:[#allocation9 + $0x50] sm:$0xff]
    %v214 = vld [vmem:[#allocation9 + $0x58] sm:$0xff]
    %v215 = vld [vmem:[#allocation9 + $0x60] sm:$0xff]
    %v216 = vld [vmem:[#allocation9 + $0x68] sm:$0xff]
    %v217 = vld [vmem:[#allocation9 + $0x70] sm:$0xff]
    %v218 = vld [vmem:[#allocation9 + $0x78] sm:$0xff]
    %v219 = vld [vmem:[%s98] sm:$0x1]
    %v221 = vlaneseq
    %v222 = vshrl.u32 %v221, 7
    %v223 = vsub.s32 0, %v222
    %v224 = vrot.slane %v219, %v223
    %226 = vmatprep.subr.mxu0 0.0
    %227 = vmatpush1.msra.mxu0 %v203
    %228 = vmatprep.subr.mxu0 0.0
    %229 = vmatpush1.msra.mxu0 %v204
    %230 = vmatprep.subr.mxu0 0.0
    %231 = vmatpush1.msra.mxu0 %v205
    %232 = vmatprep.subr.mxu0 0.0
    %233 = vmatpush1.msra.mxu0 %v206
    %234 = vmatprep.subr.mxu0 0.0
    %235 = vmatpush1.msra.mxu0 %v207
    %236 = vmatprep.subr.mxu0 0.0
    %237 = vmatpush1.msra.mxu0 %v208
    %238 = vmatprep.subr.mxu0 0.0
    %239 = vmatpush1.msra.mxu0 %v209
    %240 = vmatprep.subr.mxu0 0.0
    %241 = vmatpush1.msra.mxu0 %v210
    %242 = vmatprep.subr.mxu0 0.0
    %243 = vmatpush1.msra.mxu0 %v211
    %244 = vmatprep.subr.mxu0 0.0
    %245 = vmatpush1.msra.mxu0 %v212
    %246 = vmatprep.subr.mxu0 0.0
    %247 = vmatpush1.msra.mxu0 %v213
    %248 = vmatprep.subr.mxu0 0.0
    %249 = vmatpush1.msra.mxu0 %v214
    %250 = vmatprep.subr.mxu0 0.0
    %251 = vmatpush1.msra.mxu0 %v215
    %252 = vmatprep.subr.mxu0 0.0
    %253 = vmatpush1.msra.mxu0 %v216
    %254 = vmatprep.subr.mxu0 0.0
    %255 = vmatpush1.msra.mxu0 %v217
    %256 = vmatprep.subr.mxu0 0.0
    %257 = vmatpush1.msra.mxu0 %v218
    %258 = vmatprep.subr.mxu0 0.0
    %259 = vmatpush1.msra.mxu0 0.0
    %260 = vmatprep.subr.mxu0 0.0
    %261 = vmatpush1.msra.mxu0 0.0
    %262 = vmatprep.subr.mxu0 0.0
    %263 = vmatpush1.msra.mxu0 0.0
    %264 = vmatprep.subr.mxu0 0.0
    %265 = vmatpush1.msra.mxu0 0.0
    %266 = vmatprep.subr.mxu0 0.0
    %267 = vmatpush1.msra.mxu0 0.0
    %268 = vmatprep.subr.mxu0 0.0
    %269 = vmatpush1.msra.mxu0 0.0
    %270 = vmatprep.subr.mxu0 0.0
    %271 = vmatpush1.msra.mxu0 0.0
    %272 = vmatprep.subr.mxu0 0.0
    %273 = vmatpush1.msra.mxu0 0.0
    %274 = vmatprep.subr.mxu0 0.0
    %275 = vmatpush1.msra.mxu0 0.0
    %276 = vmatprep.subr.mxu0 0.0
    %277 = vmatpush1.msra.mxu0 0.0
    %278 = vmatprep.subr.mxu0 0.0
    %279 = vmatpush1.msra.mxu0 0.0
    %280 = vmatprep.subr.mxu0 0.0
    %281 = vmatpush1.msra.mxu0 0.0
    %282 = vmatprep.subr.mxu0 0.0
    %283 = vmatpush1.msra.mxu0 0.0
    %284 = vmatprep.subr.mxu0 0.0
    %285 = vmatpush1.msra.mxu0 0.0
    %286 = vmatprep.subr.mxu0 0.0
    %287 = vmatpush1.msra.mxu0 0.0
    %288 = vmatprep.subr.mxu0 0.0
    %289 = vmatpush1.msra.mxu0 0.0
    %290 = vmatprep.mubr.f32.mxu0 0.0
    %291 = vmatmul.mubr.f32.gmra.mrb[0].mxu0 %v202
    %v292 = vpop.f32.mrb[0].mxu0
    %v293 = vadd.f32 %v224, %v292
    %v294 = vpop.f32.mrb[0].mxu0
    %295 = vdwg.mxu0
    %v296 = vadd.f32 %v100, %v293
    %297 = vst [vmem:[#allocation10] sm:$0xff] %v296
    // Predicated region
    $region34: #{tpu_custom_call.1} parent=1 // pred_check
      _
    $region35: #{tpu_custom_call.1} parent=1 // pred_check_branch
      %299 = sbr.rel (0) target = $region37
    $region36: #{tpu_custom_call.1} parent=1 // pred_region
      %s301 = ssub.s32 128, 128
      %302 = vsyncadd [#allocation6], %s301
      %s304 = sshll.u32 [#allocation10], 4
      %s305 = int_to_ptr.vmem [resolvable:$true] %s304
      %307 = dma.vmem_to_hbm [thread:$0]  %s305, 128, %s6, [#allocation6]
    $region37: #{tpu_custom_call.1} parent=1 // pred_fallthru
      _
    // Predicated region
    $region38: #{tpu_custom_call.1} parent=1 // pred_check
      _
    $region39: #{tpu_custom_call.1} parent=1 // pred_check_branch
      %309 = sbr.rel (0) target = $region41
    $region40: #{tpu_custom_call.1} parent=1 // pred_region
      %310 = dma.done [#allocation6], 128
    $region41: #{tpu_custom_call.1} parent=1 // pred_fallthru
      _
    %311 = vsyncpa [#allocation5], 1
    %312 = vsyncpa [#allocation8], 1
    %313 = vsyncpa [#allocation6], 1

</llo_original>
